<compile_context>
chip_gen: v6e
topology: v6e:2x2x1
jax: 0.10.0
libtpu: 0.0.40
codegen_flags: <defaults>
</compile_context>

<pallas_src>
import jax
import jax.numpy as jnp
from jax.experimental import pallas as pl
from jax.experimental.pallas import tpu as pltpu


def _naive_rnn_loss_kernel(limits_ref, lastc_ref, after_ref, before_ref, ys_ref,
                           abs_out_ref, sq_out_ref, acc_abs, acc_sq):
    b = pl.program_id(0)
    c = pl.program_id(1)
    n_chunks = pl.num_programs(1)
    tile_l, _ = acc_abs.shape

    @pl.when(c == 0)
    def _():
        acc_abs[...] = jnp.zeros_like(acc_abs)
        acc_sq[...] = jnp.zeros_like(acc_sq)

    # Remaining valid timesteps for this batch row in this chunk; <= 0 means the whole
    # chunk is padding (its DMA was skipped via the clamped index_map, data is stale).
    rem = limits_ref[b] - c * tile_l

    @pl.when(rem > 0)
    def _():
        # Mask only along the time (sublane) axis: one iota + one compare per vreg.
        t_idx = jax.lax.broadcasted_iota(jnp.int32, acc_abs.shape, 0)
        valid = t_idx < rem
        # NOTE: the ragged final chunk / partially-valid tail may contain stale VMEM data;
        # jnp.where keeps it out of the sums (select does not propagate NaN/Inf from the
        # unselected operand).  Keep the where BEFORE abs/square.
        ys = ys_ref[0].astype(jnp.float32)
        da = jnp.where(valid, after_ref[0].astype(jnp.float32) - ys, 0.0)
        db = jnp.where(valid, before_ref[0].astype(jnp.float32) - ys, 0.0)
        acc_abs[...] += jnp.abs(da) + jnp.abs(db)
        acc_sq[...] += da * da + db * db

    @pl.when(c == n_chunks - 1)
    def _():
        abs_out_ref[0] = jnp.sum(acc_abs[...], axis=0, keepdims=True)
        sq_out_ref[0] = jnp.sum(acc_sq[...], axis=0, keepdims=True)


def naive_rnn_loss(after_outs, before_outs, ys, olens,
                   use_masking=True, use_weighted_masking=False,
                   tile_l=None, target_block_elems=256 * 1024):
    """Pallas implementation of NaiveRNNLoss.forward (masked / unmasked mean paths)."""
    # TODO(synk): use_weighted_masking path not implemented (module default is masked mean).
    assert not use_weighted_masking

    B, L, D = ys.shape
    olens = olens.astype(jnp.int32)
    if use_masking:
        limits = jnp.minimum(olens, jnp.int32(L))     # valid timesteps per batch row
    else:
        # Unmasked mean over all elements == masked path with olens = Lmax.
        limits = jnp.full((B,), L, dtype=jnp.int32)

    # Tile along the time axis.  Block (1, tile_l, D): last dim equals the full array dim
    # (legal for any D); tile_l must be a multiple of 8 unless it equals L.
    if tile_l is None:
        tile_l = max(8, target_block_elems // max(D, 1))
    if tile_l >= L:
        tile_l = L
    else:
        tile_l = max(8, (int(tile_l) // 8) * 8)
    n_chunks = pl.cdiv(L, tile_l)

    # Last chunk index that contains any valid data (>= 0 so the clamped index_map is legal).
    last_chunk = jnp.maximum((limits + tile_l - 1) // tile_l - 1, 0).astype(jnp.int32)

    def tensor_map(b, c, limits_ref, lastc_ref):
        # Clamp the chunk index: fully-padded tail chunks reuse the previous block index,
        # so Pallas does not re-issue their HBM->VMEM DMA (bandwidth saved ~ padding fraction).
        return (b, jnp.minimum(c, lastc_ref[b]), 0)

    def out_map(b, c, limits_ref, lastc_ref):
        return (b, 0, 0)

    tensor_spec = pl.BlockSpec((1, tile_l, D), tensor_map)
    out_spec = pl.BlockSpec((1, 1, D), out_map)

    in_bytes = 3 * B * L * D * ys.dtype.itemsize
    out_bytes = 2 * B * D * 4
    cost = pl.CostEstimate(flops=10 * B * L * D, transcendentals=0,
                           bytes_accessed=in_bytes + out_bytes)

    abs_parts, sq_parts = pl.pallas_call(
        _naive_rnn_loss_kernel,
        out_shape=(
            jax.ShapeDtypeStruct((B, 1, D), jnp.float32),
            jax.ShapeDtypeStruct((B, 1, D), jnp.float32),
        ),
        grid_spec=pltpu.PrefetchScalarGridSpec(
            num_scalar_prefetch=2,
            grid=(B, n_chunks),
            in_specs=[tensor_spec, tensor_spec, tensor_spec],
            out_specs=(out_spec, out_spec),
            scratch_shapes=[
                pltpu.VMEM((tile_l, D), jnp.float32),
                pltpu.VMEM((tile_l, D), jnp.float32),
            ],
        ),
        compiler_params=pltpu.CompilerParams(
            dimension_semantics=("parallel", "arbitrary"),
        ),
        cost_estimate=cost,
    )(limits, last_chunk, after_outs, before_outs, ys)

    # N = number of masked-selected elements = D * sum(min(olens, L)).  If all olens are 0,
    # cnt == 0 and the result is nan/inf (matches torch masked_select + mean semantics).
    cnt = jnp.sum(limits).astype(jnp.float32) * jnp.float32(D)
    l1 = jnp.sum(abs_parts) / cnt
    mse = jnp.sum(sq_parts) / cnt
    return l1, mse


def _reference(after_outs, before_outs, ys, olens):
    """Pure-JAX reference mirroring the PyTorch masked_select + mean path."""
    B, L, D = ys.shape
    mask = (jnp.arange(L)[None, :] < olens[:, None])[:, :, None]  # (B, L, 1)
    mask_f = mask.astype(jnp.float32)
    cnt = jnp.sum(mask_f) * D
    da = (after_outs - ys) * mask_f
    db = (before_outs - ys) * mask_f
    l1 = (jnp.sum(jnp.abs(da)) + jnp.sum(jnp.abs(db))) / cnt
    mse = (jnp.sum(da * da) + jnp.sum(db * db)) / cnt
    return l1, mse


if __name__ == "__main__":
    # Case 1: small Tacotron-like shapes, single chunk.
    key = jax.random.PRNGKey(0)
    B, Lmax, odim = 2, 16, 8
    k1, k2, k3 = jax.random.split(key, 3)
    ys = jax.random.normal(k1, (B, Lmax, odim), dtype=jnp.float32)
    before_outs = jax.random.normal(k2, (B, Lmax, odim), dtype=jnp.float32)
    after_outs = before_outs + 0.1 * jax.random.normal(k3, (B, Lmax, odim), dtype=jnp.float32)
    olens = jnp.array([12, 16], dtype=jnp.int32)

    l1, mse = naive_rnn_loss(after_outs, before_outs, ys, olens)
    jax.block_until_ready((l1, mse))
    l1_ref, mse_ref = _reference(after_outs, before_outs, ys, olens)
    assert jnp.allclose(l1, l1_ref, rtol=1e-5, atol=1e-5), (l1, l1_ref)
    assert jnp.allclose(mse, mse_ref, rtol=1e-5, atol=1e-5), (mse, mse_ref)

    # Case 2: multi-chunk, ragged final chunk, heavy length padding
    # (exercises the clamped index_map / chunk-skip path and the masked partial chunk).
    B2, L2, D2 = 3, 40, 24
    k4, k5, k6 = jax.random.split(jax.random.PRNGKey(1), 3)
    ys2 = jax.random.normal(k4, (B2, L2, D2), dtype=jnp.float32)
    before2 = jax.random.normal(k5, (B2, L2, D2), dtype=jnp.float32)
    after2 = before2 + 0.1 * jax.random.normal(k6, (B2, L2, D2), dtype=jnp.float32)
    olens2 = jnp.array([5, 40, 17], dtype=jnp.int32)

    l1b, mseb = naive_rnn_loss(after2, before2, ys2, olens2, tile_l=16)
    jax.block_until_ready((l1b, mseb))
    l1b_ref, mseb_ref = _reference(after2, before2, ys2, olens2)
    assert jnp.allclose(l1b, l1b_ref, rtol=1e-5, atol=1e-5), (l1b, l1b_ref)
    assert jnp.allclose(mseb, mseb_ref, rtol=1e-5, atol=1e-5), (mseb, mseb_ref)

    print("KERNEL_OK")
</pallas_src>

<mosaic_0001>
module attributes {stable_mosaic.version = 11 : i64} {
  func.func @_naive_rnn_loss_kernel(%arg0: i32, %arg1: i32, %arg2: memref<2xi32, #tpu.memory_space<smem>>, %arg3: memref<2xi32, #tpu.memory_space<smem>>, %arg4: memref<1x16x8xf32, #tpu.memory_space<vmem>>, %arg5: memref<1x16x8xf32, #tpu.memory_space<vmem>>, %arg6: memref<1x16x8xf32, #tpu.memory_space<vmem>>, %arg7: memref<1x1x8xf32, #tpu.memory_space<vmem>>, %arg8: memref<1x1x8xf32, #tpu.memory_space<vmem>>, %arg9: memref<16x8xf32, #tpu.memory_space<vmem>>, %arg10: memref<16x8xf32, #tpu.memory_space<vmem>>) attributes {dimension_semantics = [#tpu.dimension_semantics<parallel>, #tpu.dimension_semantics<arbitrary>], iteration_bounds = array<i64: 2, 1>, scalar_prefetch = 2 : i64, scratch_operands = 2 : i64, tpu.core_type = #tpu.core_type<tc>, window_params = [{transform_indices = @transform_0, window_bounds = array<i64: 1, 16, 8>}, {transform_indices = @transform_1, window_bounds = array<i64: 1, 16, 8>}, {transform_indices = @transform_2, window_bounds = array<i64: 1, 16, 8>}, {transform_indices = @transform_3, window_bounds = array<i64: 1, 1, 8>}, {transform_indices = @transform_4, window_bounds = array<i64: 1, 1, 8>}]} {
    %c0_i32 = arith.constant 0 : i32
    %0 = arith.cmpi eq, %arg1, %c0_i32 : i32
    %1 = arith.extui %0 : i1 to i32
    %c0_i32_0 = arith.constant 0 : i32
    %2 = arith.cmpi ne, %1, %c0_i32_0 : i32
    scf.if %2 {
      %cst = arith.constant 0.000000e+00 : f32
      %13 = vector.broadcast %cst : f32 to vector<16x8xf32>
      %c0 = arith.constant 0 : index
      %c0_5 = arith.constant 0 : index
      %14 = vector.load %arg9[%c0, %c0_5] : memref<16x8xf32, #tpu.memory_space<vmem>>, vector<16x8xf32>
      tpu.vector_store %arg9[%c0, %c0_5], %13 {strides = array<i32>} : memref<16x8xf32, #tpu.memory_space<vmem>>, vector<16x8xf32>,
      %cst_6 = arith.constant 0.000000e+00 : f32
      %15 = vector.broadcast %cst_6 : f32 to vector<16x8xf32>
      %c0_7 = arith.constant 0 : index
      %c0_8 = arith.constant 0 : index
      %16 = vector.load %arg10[%c0_7, %c0_8] : memref<16x8xf32, #tpu.memory_space<vmem>>, vector<16x8xf32>
      tpu.vector_store %arg10[%c0_7, %c0_8], %15 {strides = array<i32>} : memref<16x8xf32, #tpu.memory_space<vmem>>, vector<16x8xf32>,
    } else {
    }
    %3 = arith.index_cast %arg0 : i32 to index
    %4 = memref.load %arg2[%3] : memref<2xi32, #tpu.memory_space<smem>>
    %c16_i32 = arith.constant 16 : i32
    %5 = arith.muli %arg1, %c16_i32 : i32
    %6 = arith.subi %4, %5 : i32
    %c0_i32_1 = arith.constant 0 : i32
    %7 = arith.cmpi sgt, %6, %c0_i32_1 : i32
    %8 = arith.extui %7 : i1 to i32
    %c0_i32_2 = arith.constant 0 : i32
    %9 = arith.cmpi ne, %8, %c0_i32_2 : i32
    scf.if %9 {
      %13 = tpu.iota {dimensions = array<i32: 0>} : vector<16x8xi32>
      %14 = vector.broadcast %6 : i32 to vector<16x8xi32>
      %15 = arith.cmpi slt, %13, %14 : vector<16x8xi32>
      %c0 = arith.constant 0 : index
      %c0_5 = arith.constant 0 : index
      %c0_6 = arith.constant 0 : index
      %16 = vector.load %arg6[%c0, %c0_5, %c0_6] : memref<1x16x8xf32, #tpu.memory_space<vmem>>, vector<1x16x8xf32>
      %17 = vector.shape_cast %16 : vector<1x16x8xf32> to vector<16x8xf32>
      %c0_7 = arith.constant 0 : index
      %c0_8 = arith.constant 0 : index
      %c0_9 = arith.constant 0 : index
      %18 = vector.load %arg4[%c0_7, %c0_8, %c0_9] : memref<1x16x8xf32, #tpu.memory_space<vmem>>, vector<1x16x8xf32>
      %19 = vector.shape_cast %18 : vector<1x16x8xf32> to vector<16x8xf32>
      %20 = arith.subf %19, %17 : vector<16x8xf32>
      %cst = arith.constant 0.000000e+00 : f32
      %21 = vector.broadcast %cst : f32 to vector<16x8xf32>
      %22 = arith.select %15, %20, %21 : vector<16x8xi1>, vector<16x8xf32>
      %c0_10 = arith.constant 0 : index
      %c0_11 = arith.constant 0 : index
      %c0_12 = arith.constant 0 : index
      %23 = vector.load %arg5[%c0_10, %c0_11, %c0_12] : memref<1x16x8xf32, #tpu.memory_space<vmem>>, vector<1x16x8xf32>
      %24 = vector.shape_cast %23 : vector<1x16x8xf32> to vector<16x8xf32>
      %25 = arith.subf %24, %17 : vector<16x8xf32>
      %cst_13 = arith.constant 0.000000e+00 : f32
      %26 = vector.broadcast %cst_13 : f32 to vector<16x8xf32>
      %27 = arith.select %15, %25, %26 : vector<16x8xi1>, vector<16x8xf32>
      %c0_14 = arith.constant 0 : index
      %c0_15 = arith.constant 0 : index
      %28 = vector.load %arg9[%c0_14, %c0_15] : memref<16x8xf32, #tpu.memory_space<vmem>>, vector<16x8xf32>
      %29 = math.absf %22 : vector<16x8xf32>
      %30 = math.absf %27 : vector<16x8xf32>
      %31 = arith.addf %29, %30 : vector<16x8xf32>
      %32 = arith.addf %28, %31 : vector<16x8xf32>
      %c0_16 = arith.constant 0 : index
      %c0_17 = arith.constant 0 : index
      %33 = vector.load %arg9[%c0_16, %c0_17] : memref<16x8xf32, #tpu.memory_space<vmem>>, vector<16x8xf32>
      tpu.vector_store %arg9[%c0_16, %c0_17], %32 {strides = array<i32>} : memref<16x8xf32, #tpu.memory_space<vmem>>, vector<16x8xf32>,
      %c0_18 = arith.constant 0 : index
      %c0_19 = arith.constant 0 : index
      %34 = vector.load %arg10[%c0_18, %c0_19] : memref<16x8xf32, #tpu.memory_space<vmem>>, vector<16x8xf32>
      %35 = arith.mulf %22, %22 : vector<16x8xf32>
      %36 = arith.mulf %27, %27 : vector<16x8xf32>
      %37 = arith.addf %35, %36 : vector<16x8xf32>
      %38 = arith.addf %34, %37 : vector<16x8xf32>
      %c0_20 = arith.constant 0 : index
      %c0_21 = arith.constant 0 : index
      %39 = vector.load %arg10[%c0_20, %c0_21] : memref<16x8xf32, #tpu.memory_space<vmem>>, vector<16x8xf32>
      tpu.vector_store %arg10[%c0_20, %c0_21], %38 {strides = array<i32>} : memref<16x8xf32, #tpu.memory_space<vmem>>, vector<16x8xf32>,
    } else {
    }
    %c0_i32_3 = arith.constant 0 : i32
    %10 = arith.cmpi eq, %arg1, %c0_i32_3 : i32
    %11 = arith.extui %10 : i1 to i32
    %c0_i32_4 = arith.constant 0 : i32
    %12 = arith.cmpi ne, %11, %c0_i32_4 : i32
    scf.if %12 {
      %c0 = arith.constant 0 : index
      %c0_5 = arith.constant 0 : index
      %13 = vector.load %arg9[%c0, %c0_5] : memref<16x8xf32, #tpu.memory_space<vmem>>, vector<16x8xf32>
      %cst = arith.constant dense<0.000000e+00> : vector<8xf32>
      %14 = vector.multi_reduction <add>, %13, %cst [0] : vector<16x8xf32> to vector<8xf32>
      %15 = vector.shape_cast %14 : vector<8xf32> to vector<1x8xf32>
      %c0_6 = arith.constant 0 : index
      %c0_7 = arith.constant 0 : index
      %c0_8 = arith.constant 0 : index
      %16 = vector.load %arg7[%c0_6, %c0_7, %c0_8] : memref<1x1x8xf32, #tpu.memory_space<vmem>>, vector<1x1x8xf32>
      %17 = vector.shape_cast %16 : vector<1x1x8xf32> to vector<1x8xf32>
      %18 = vector.shape_cast %15 : vector<1x8xf32> to vector<1x1x8xf32>
      tpu.vector_store %arg7[%c0_6, %c0_7, %c0_8], %18 {strides = array<i32>} : memref<1x1x8xf32, #tpu.memory_space<vmem>>, vector<1x1x8xf32>,
      %c0_9 = arith.constant 0 : index
      %c0_10 = arith.constant 0 : index
      %19 = vector.load %arg10[%c0_9, %c0_10] : memref<16x8xf32, #tpu.memory_space<vmem>>, vector<16x8xf32>
      %cst_11 = arith.constant dense<0.000000e+00> : vector<8xf32>
      %20 = vector.multi_reduction <add>, %19, %cst_11 [0] : vector<16x8xf32> to vector<8xf32>
      %21 = vector.shape_cast %20 : vector<8xf32> to vector<1x8xf32>
      %c0_12 = arith.constant 0 : index
      %c0_13 = arith.constant 0 : index
      %c0_14 = arith.constant 0 : index
      %22 = vector.load %arg8[%c0_12, %c0_13, %c0_14] : memref<1x1x8xf32, #tpu.memory_space<vmem>>, vector<1x1x8xf32>
      %23 = vector.shape_cast %22 : vector<1x1x8xf32> to vector<1x8xf32>
      %24 = vector.shape_cast %21 : vector<1x8xf32> to vector<1x1x8xf32>
      tpu.vector_store %arg8[%c0_12, %c0_13, %c0_14], %24 {strides = array<i32>} : memref<1x1x8xf32, #tpu.memory_space<vmem>>, vector<1x1x8xf32>,
    } else {
    }
    return
  }
  func.func @transform_0(%arg0: i32, %arg1: i32, %arg2: memref<2xi32, #tpu.memory_space<smem>>, %arg3: memref<2xi32, #tpu.memory_space<smem>>) -> (i32, i32, i32) {
    %0 = arith.index_cast %arg0 : i32 to index
    %1 = memref.load %arg3[%0] : memref<2xi32, #tpu.memory_space<smem>>
    %2 = arith.minsi %arg1, %1 : i32
    %c0_i32 = arith.constant 0 : i32
    %c0_i32_0 = arith.constant 0 : i32
    return %arg0, %2, %c0_i32 : i32, i32, i32
  }
  func.func @transform_1(%arg0: i32, %arg1: i32, %arg2: memref<2xi32, #tpu.memory_space<smem>>, %arg3: memref<2xi32, #tpu.memory_space<smem>>) -> (i32, i32, i32) {
    %0 = arith.index_cast %arg0 : i32 to index
    %1 = memref.load %arg3[%0] : memref<2xi32, #tpu.memory_space<smem>>
    %2 = arith.minsi %arg1, %1 : i32
    %c0_i32 = arith.constant 0 : i32
    %c0_i32_0 = arith.constant 0 : i32
    return %arg0, %2, %c0_i32 : i32, i32, i32
  }
  func.func @transform_2(%arg0: i32, %arg1: i32, %arg2: memref<2xi32, #tpu.memory_space<smem>>, %arg3: memref<2xi32, #tpu.memory_space<smem>>) -> (i32, i32, i32) {
    %0 = arith.index_cast %arg0 : i32 to index
    %1 = memref.load %arg3[%0] : memref<2xi32, #tpu.memory_space<smem>>
    %2 = arith.minsi %arg1, %1 : i32
    %c0_i32 = arith.constant 0 : i32
    %c0_i32_0 = arith.constant 0 : i32
    return %arg0, %2, %c0_i32 : i32, i32, i32
  }
  func.func @transform_3(%arg0: i32, %arg1: i32, %arg2: memref<2xi32, #tpu.memory_space<smem>>, %arg3: memref<2xi32, #tpu.memory_space<smem>>) -> (i32, i32, i32) {
    %c0_i32 = arith.constant 0 : i32
    %c0_i32_0 = arith.constant 0 : i32
    %c0_i32_1 = arith.constant 0 : i32
    return %arg0, %c0_i32, %c0_i32_0 : i32, i32, i32
  }
  func.func @transform_4(%arg0: i32, %arg1: i32, %arg2: memref<2xi32, #tpu.memory_space<smem>>, %arg3: memref<2xi32, #tpu.memory_space<smem>>) -> (i32, i32, i32) {
    %c0_i32 = arith.constant 0 : i32
    %c0_i32_0 = arith.constant 0 : i32
    %c0_i32_1 = arith.constant 0 : i32
    return %arg0, %c0_i32, %c0_i32_0 : i32, i32, i32
  }
}

</mosaic_0001>

<llo_original>
// kernel: tpu_custom_call.1
$region0: #{tpu_custom_call.1}
  #allocation0 [shape = 'u32[]', space=smem, size = 0x4, offset = 0x4, fixed_abs, tag = 'smem constant byte address 0x4 - core index']
  #allocation1 [shape = 'u32[144,128]{1,0:T(1,128)}', space=vmem, size = 0x12000, scoped, tag = 'internal scratch']
  #allocation2 [shape = 'f32[16,8]{1,0:T(8,128)}', space=vmem, size = 0x2000, scoped, tag = 'scratch operand']
  #allocation3 [shape = 'f32[16,8]{1,0:T(8,128)}', space=vmem, size = 0x2000, scoped, tag = 'scratch operand']
  #allocation4 [shape = 's32[1]{0}', space=sflag, size = 0x4, scoped, tag = 'scoped memory for tpu_custom_call.1']
  #allocation5 [shape = 'u8[512]{0}', space=smem, size = 0x200, scoped, tag = 'prefetched SMEM operand 0']
  #allocation6 [shape = 'u8[512]{0}', space=smem, size = 0x200, scoped, tag = 'prefetched SMEM operand 1']
  %s0 = inlined_call_operand.vmem [shape: s32[2], index: 0, kind: input, shape index: {}]
  %s1 = inlined_call_operand.vmem [shape: s32[2], index: 1, kind: input, shape index: {}]
  %s2 = inlined_call_operand.vmem [shape: f32[2,16,8], index: 2, kind: input, shape index: {}]
  %s3 = inlined_call_operand.vmem [shape: f32[2,16,8], index: 3, kind: input, shape index: {}]
  %s4 = inlined_call_operand.vmem [shape: f32[2,16,8], index: 4, kind: input, shape index: {}]
  %s5 = inlined_call_operand.hbm [shape: f32[2,1,8], index: 5, kind: output, shape index: {0}]
  %s6 = inlined_call_operand.hbm [shape: f32[2,1,8], index: 6, kind: output, shape index: {1}]
  %7 = xla_tuple %s5, %s6
  %s8 = sld [smem:[#allocation0]]
  $region65: #{tpu_custom_call.1} parent=0
    _
  %s10 = ssub.s32 1, %s8
  %s11 = scalar_select 0, %s10, %s8
  %s12 = sshll.u32 %s0, 4
  %s13 = int_to_ptr.vmem [resolvable:$true] %s12
  %15 = dma.vmem_to_smem %s13, 16, [#allocation5], [#allocation4]
  %s16 = sshll.u32 %s1, 4
  %s17 = int_to_ptr.vmem [resolvable:$true] %s16
  %19 = dma.vmem_to_smem %s17, 16, [#allocation6], [#allocation4]
  %20 = dma.done [#allocation4], 32
  %21 = sfence
  $region1: #{tpu_custom_call.1} parent=0
    #allocation7 [shape = 'u8[1024]{0}', space=vmem, size = 0x400, scoped, tag = 'output window, operand 0']
    #allocation8 [shape = 's32[2]{0}', space=sflag, size = 0x8, scoped, tag = 'scoped memory for tpu_custom_call.1']
    #allocation9 [shape = 'u8[1024]{0}', space=vmem, size = 0x400, scoped, tag = 'output window, operand 1']
    #allocation10 [shape = 's32[2]{0}', space=sflag, size = 0x8, scoped, tag = 'scoped memory for tpu_custom_call.1']
    %22 = vsyncpa [#allocation8], 0
    %s23 = scalar_lea.sflag [#allocation8], 1
    %24 = vsyncpa %s23, 0
    %25 = vsyncpa [#allocation10], 0
    %s26 = scalar_lea.sflag [#allocation10], 1
    %27 = vsyncpa %s26, 0
    loop: start=0, step=1, limit=4
    $region2: #{tpu_custom_call.1} parent=1 // loop_pre_header
      _
    $region3: #{tpu_custom_call.1} parent=1 // loop_header
      %s29 = sphi 0, %s33
      %p30 = scmp.ge.s32.totalorder %s29, 4
      %s36 = sphi 0, %s48
      %s37 = sphi 0, %s44
      %s38 = sphi 0, %s36
      %s39 = sphi 0, %s37
      %s40 = sphi 0, %s38
      %s41 = sphi 0, %s39
      %s59 = sphi 0, %s61
      %s62 = sphi 0, %s59
      %s63 = sphi 0, %s62
      %s79 = sphi 0, %s63
      %s93 = sphi 0, %s95
      %s96 = sphi 0, %s93
      %s97 = sphi 0, %s96
      %s113 = sphi 0, %s97
      %s127 = sphi 0, %s129
      %s130 = sphi 0, %s127
      %s131 = sphi 0, %s130
      %s147 = sphi 0, %s131
      %s153 = sphi 0, %s155
      %s156 = sphi 0, %s153
      %s157 = sphi 0, %s156
      %s173 = sphi 0, %s157
      %s179 = sphi 0, %s181
      %s182 = sphi 0, %s179
      %s183 = sphi 0, %s182
      %s199 = sphi 0, %s183
    $region4: #{tpu_custom_call.1} parent=1 // loop_header_branch
      %32 = sbr.rel (%p30) target = $region8
    $region5: #{tpu_custom_call.1} parent=1 // loop_body
      %s34 = ssub.s32 %s29, 1
      %s35 = ssub.s32 %s29, 2
      %s42 = sadd.s32 1, %s37
      %p43 = scmp.ge.s32.totalorder %s42, 1
      %s44 = scalar_select %p43, 0, %s42
      %s45 = sadd.s32 1, %s36
      %s46 = scalar_select %p43, %s45, %s36
      %p47 = scmp.ge.s32.totalorder %s46, 2
      %s48 = scalar_select %p47, 0, %s46
      %s49 = sld [smem:[#allocation6 + %s36]]
      %p50 = scmp.lt.s32.totalorder %s37, %s49
      %s51 = scalar_select %p50, %s37, %s49
      %s52 = sld [smem:[#allocation6 + %s48]]
      %p53 = scmp.lt.s32.totalorder %s44, %s52
      %s54 = scalar_select %p53, %s44, %s52
      %s55 = ssub.s32 %s36, %s48
      %s56 = ssub.s32 %s51, %s54
      %s57 = sor.u32 %s55, %s56
      %p58 = scmp.eq.s32.totalorder %s57, 0
      %s60 = sadd.s32 %s59, 1
      %s61 = scalar_select %p58, %s59, %s60
      %p64 = pneg %p58
      %p65 = scmp.eq.s32.totalorder %s29, 1
      %p66 = por %p64, %p65
      %p67 = scmp.ne.s32.totalorder %s59, %s62
      %p68 = scmp.eq.s32.totalorder %s29, 0
      %p69 = por %p67, %p68
      %p70 = scmp.ne.s32.totalorder %s59, %s62
      %p71 = scmp.eq.s32.totalorder %s34, 1
      %p72 = por %p70, %p71
      %p73 = scmp.ne.s32.totalorder %s62, %s63
      %p74 = scmp.eq.s32.totalorder %s34, 0
      %p75 = por %p73, %p74
      %p76 = scmp.ne.s32.totalorder %s62, %s63
      %p77 = scmp.eq.s32.totalorder %s35, 1
      %p78 = por %p76, %p77
      %p80 = scmp.ne.s32.totalorder %s63, %s79
      %p81 = scmp.eq.s32.totalorder %s35, 0
      %p82 = por %p80, %p81
      %s83 = sld [smem:[#allocation6 + %s36]]
      %p84 = scmp.lt.s32.totalorder %s37, %s83
      %s85 = scalar_select %p84, %s37, %s83
      %s86 = sld [smem:[#allocation6 + %s48]]
      %p87 = scmp.lt.s32.totalorder %s44, %s86
      %s88 = scalar_select %p87, %s44, %s86
      %s89 = ssub.s32 %s36, %s48
      %s90 = ssub.s32 %s85, %s88
      %s91 = sor.u32 %s89, %s90
      %p92 = scmp.eq.s32.totalorder %s91, 0
      %s94 = sadd.s32 %s93, 1
      %s95 = scalar_select %p92, %s93, %s94
      %p98 = pneg %p92
      %p99 = scmp.eq.s32.totalorder %s29, 1
      %p100 = por %p98, %p99
      %p101 = scmp.ne.s32.totalorder %s93, %s96
      %p102 = scmp.eq.s32.totalorder %s29, 0
      %p103 = por %p101, %p102
      %p104 = scmp.ne.s32.totalorder %s93, %s96
      %p105 = scmp.eq.s32.totalorder %s34, 1
      %p106 = por %p104, %p105
      %p107 = scmp.ne.s32.totalorder %s96, %s97
      %p108 = scmp.eq.s32.totalorder %s34, 0
      %p109 = por %p107, %p108
      %p110 = scmp.ne.s32.totalorder %s96, %s97
      %p111 = scmp.eq.s32.totalorder %s35, 1
      %p112 = por %p110, %p111
      %p114 = scmp.ne.s32.totalorder %s97, %s113
      %p115 = scmp.eq.s32.totalorder %s35, 0
      %p116 = por %p114, %p115
      %s117 = sld [smem:[#allocation6 + %s36]]
      %p118 = scmp.lt.s32.totalorder %s37, %s117
      %s119 = scalar_select %p118, %s37, %s117
      %s120 = sld [smem:[#allocation6 + %s48]]
      %p121 = scmp.lt.s32.totalorder %s44, %s120
      %s122 = scalar_select %p121, %s44, %s120
      %s123 = ssub.s32 %s36, %s48
      %s124 = ssub.s32 %s119, %s122
      %s125 = sor.u32 %s123, %s124
      %p126 = scmp.eq.s32.totalorder %s125, 0
      %s128 = sadd.s32 %s127, 1
      %s129 = scalar_select %p126, %s127, %s128
      %p132 = pneg %p126
      %p133 = scmp.eq.s32.totalorder %s29, 1
      %p134 = por %p132, %p133
      %p135 = scmp.ne.s32.totalorder %s127, %s130
      %p136 = scmp.eq.s32.totalorder %s29, 0
      %p137 = por %p135, %p136
      %p138 = scmp.ne.s32.totalorder %s127, %s130
      %p139 = scmp.eq.s32.totalorder %s34, 1
      %p140 = por %p138, %p139
      %p141 = scmp.ne.s32.totalorder %s130, %s131
      %p142 = scmp.eq.s32.totalorder %s34, 0
      %p143 = por %p141, %p142
      %p144 = scmp.ne.s32.totalorder %s130, %s131
      %p145 = scmp.eq.s32.totalorder %s35, 1
      %p146 = por %p144, %p145
      %p148 = scmp.ne.s32.totalorder %s131, %s147
      %p149 = scmp.eq.s32.totalorder %s35, 0
      %p150 = por %p148, %p149
      %s151 = ssub.s32 %s36, %s48
      %p152 = scmp.eq.s32.totalorder %s151, 0
      %s154 = sadd.s32 %s153, 1
      %s155 = scalar_select %p152, %s153, %s154
      %p158 = pneg %p152
      %p159 = scmp.eq.s32.totalorder %s29, 1
      %p160 = por %p158, %p159
      %p161 = scmp.ne.s32.totalorder %s153, %s156
      %p162 = scmp.eq.s32.totalorder %s29, 0
      %p163 = por %p161, %p162
      %p164 = scmp.ne.s32.totalorder %s153, %s156
      %p165 = scmp.eq.s32.totalorder %s34, 1
      %p166 = por %p164, %p165
      %p167 = scmp.ne.s32.totalorder %s156, %s157
      %p168 = scmp.eq.s32.totalorder %s34, 0
      %p169 = por %p167, %p168
      %p170 = scmp.ne.s32.totalorder %s156, %s157
      %p171 = scmp.eq.s32.totalorder %s35, 1
      %p172 = por %p170, %p171
      %p174 = scmp.ne.s32.totalorder %s157, %s173
      %p175 = scmp.eq.s32.totalorder %s35, 0
      %p176 = por %p174, %p175
      %s177 = ssub.s32 %s36, %s48
      %p178 = scmp.eq.s32.totalorder %s177, 0
      %s180 = sadd.s32 %s179, 1
      %s181 = scalar_select %p178, %s179, %s180
      %p184 = pneg %p178
      %p185 = scmp.eq.s32.totalorder %s29, 1
      %p186 = por %p184, %p185
      %p187 = scmp.ne.s32.totalorder %s179, %s182
      %p188 = scmp.eq.s32.totalorder %s29, 0
      %p189 = por %p187, %p188
      %p190 = scmp.ne.s32.totalorder %s179, %s182
      %p191 = scmp.eq.s32.totalorder %s34, 1
      %p192 = por %p190, %p191
      %p193 = scmp.ne.s32.totalorder %s182, %s183
      %p194 = scmp.eq.s32.totalorder %s34, 0
      %p195 = por %p193, %p194
      %p196 = scmp.ne.s32.totalorder %s182, %s183
      %p197 = scmp.eq.s32.totalorder %s35, 1
      %p198 = por %p196, %p197
      %p200 = scmp.ne.s32.totalorder %s183, %s199
      %p201 = scmp.eq.s32.totalorder %s35, 0
      %p202 = por %p200, %p201
      %p203 = scmp.le.s32.totalorder 1, %s29
      %p204 = scmp.lt.s32.totalorder %s29, 3
      %p205 = pnand %p203, %p204
      %p206 = pneg %p205
      // Predicated region
      $region9: #{tpu_custom_call.1} parent=5 // pred_check
        _
      $region10: #{tpu_custom_call.1} parent=5 // pred_check_branch
        %208 = sbr.rel (%p205) target = $region12
      $region11: #{tpu_custom_call.1} parent=5 // pred_region
        %s209 = ssub.s32 %s29, 1
      $region12: #{tpu_custom_call.1} parent=5 // pred_fallthru
        _
      %p210 = scmp.lt.s32.totalorder %s29, 2
      // Predicated region
      $region13: #{tpu_custom_call.1} parent=5 // pred_check
        %p211 = pneg %p210
      $region14: #{tpu_custom_call.1} parent=5 // pred_check_branch
        %213 = sbr.rel (%p211) target = $region16
      $region15: #{tpu_custom_call.1} parent=5 // pred_region
        // Predicated region
        $region17: #{tpu_custom_call.1} parent=15 // pred_check
          %p214 = pneg %p69
        $region18: #{tpu_custom_call.1} parent=15 // pred_check_branch
          %216 = sbr.rel (%p214) target = $region20
        $region19: #{tpu_custom_call.1} parent=15 // pred_region
          %s217 = sld [smem:[#allocation6 + %s36]]
          %p218 = scmp.lt.s32.totalorder %s37, %s217
          %s219 = scalar_select %p218, %s37, %s217
          %s220 = smul.u32 2, %s219
          %p221 = scmp.lt.s32.totalorder %s36, 1
          %s222 = scalar_select %p221, %s36, 1
          %p223 = scmp.lt.s32.totalorder %s220, 1
          %s224 = scalar_select %p223, %s220, 1
          %s225 = smul.addr %s222, 2
          %s226 = sadd.s32 %s224, %s225
          %s227 = smul.addr %s226, 8
          %s228 = scalar_lea.vmem %s2, %s227
          %s229 = sld [smem:[#allocation6 + %s36]]
          %p230 = scmp.lt.s32.totalorder %s37, %s229
          %s231 = scalar_select %p230, %s37, %s229
          %s232 = smul.u32 2, %s231
        $region20: #{tpu_custom_call.1} parent=15 // pred_fallthru
          _
        // Predicated region
        $region21: #{tpu_custom_call.1} parent=15 // pred_check
          %p233 = pneg %p103
        $region22: #{tpu_custom_call.1} parent=15 // pred_check_branch
          %235 = sbr.rel (%p233) target = $region24
        $region23: #{tpu_custom_call.1} parent=15 // pred_region
          %s236 = sld [smem:[#allocation6 + %s36]]
          %p237 = scmp.lt.s32.totalorder %s37, %s236
          %s238 = scalar_select %p237, %s37, %s236
          %s239 = smul.u32 2, %s238
          %p240 = scmp.lt.s32.totalorder %s36, 1
          %s241 = scalar_select %p240, %s36, 1
          %p242 = scmp.lt.s32.totalorder %s239, 1
          %s243 = scalar_select %p242, %s239, 1
          %s244 = smul.addr %s241, 2
          %s245 = sadd.s32 %s243, %s244
          %s246 = smul.addr %s245, 8
          %s247 = scalar_lea.vmem %s3, %s246
          %s248 = sld [smem:[#allocation6 + %s36]]
          %p249 = scmp.lt.s32.totalorder %s37, %s248
          %s250 = scalar_select %p249, %s37, %s248
          %s251 = smul.u32 2, %s250
        $region24: #{tpu_custom_call.1} parent=15 // pred_fallthru
          _
        // Predicated region
        $region25: #{tpu_custom_call.1} parent=15 // pred_check
          %p252 = pneg %p137
        $region26: #{tpu_custom_call.1} parent=15 // pred_check_branch
          %254 = sbr.rel (%p252) target = $region28
        $region27: #{tpu_custom_call.1} parent=15 // pred_region
          %s255 = sld [smem:[#allocation6 + %s36]]
          %p256 = scmp.lt.s32.totalorder %s37, %s255
          %s257 = scalar_select %p256, %s37, %s255
          %s258 = smul.u32 2, %s257
          %p259 = scmp.lt.s32.totalorder %s36, 1
          %s260 = scalar_select %p259, %s36, 1
          %p261 = scmp.lt.s32.totalorder %s258, 1
          %s262 = scalar_select %p261, %s258, 1
          %s263 = smul.addr %s260, 2
          %s264 = sadd.s32 %s262, %s263
          %s265 = smul.addr %s264, 8
          %s266 = scalar_lea.vmem %s4, %s265
          %s267 = sld [smem:[#allocation6 + %s36]]
          %p268 = scmp.lt.s32.totalorder %s37, %s267
          %s269 = scalar_select %p268, %s37, %s267
          %s270 = smul.u32 2, %s269
        $region28: #{tpu_custom_call.1} parent=15 // pred_fallthru
          _
      $region16: #{tpu_custom_call.1} parent=5 // pred_fallthru
        _
      %p271 = scmp.le.s32.totalorder 1, %s29
      %p272 = scmp.lt.s32.totalorder %s29, 3
      %p273 = pnand %p271, %p272
      %p274 = pneg %p273
      // Predicated region
      $region29: #{tpu_custom_call.1} parent=5 // pred_check
        _
      $region30: #{tpu_custom_call.1} parent=5 // pred_check_branch
        %276 = sbr.rel (%p273) target = $region32
      $region31: #{tpu_custom_call.1} parent=5 // pred_region
        %s277 = ssub.s32 %s29, 1
        %s278 = sld [smem:[#allocation6 + %s38]]
        %p279 = scmp.lt.s32.totalorder %s39, %s278
        %s280 = scalar_select %p279, %s39, %s278
        %s281 = smul.u32 2, %s280
        %p282 = scmp.lt.s32.totalorder %s38, 1
        %s283 = scalar_select %p282, %s38, 1
        %p284 = scmp.lt.s32.totalorder %s281, 1
        %s285 = scalar_select %p284, %s281, 1
        %s286 = smul.addr %s283, 2
        %s287 = sadd.s32 %s285, %s286
        %s288 = smul.addr %s287, 8
        %s289 = scalar_lea.vmem %s2, %s288
        %p290 = pneg %p75
        %p291 = pneg %p72
        %s292 = sld [smem:[#allocation6 + %s38]]
        %p293 = scmp.lt.s32.totalorder %s39, %s292
        %s294 = scalar_select %p293, %s39, %s292
        %s295 = smul.u32 2, %s294
        %p296 = scmp.lt.s32.totalorder %s38, 1
        %s297 = scalar_select %p296, %s38, 1
        %p298 = scmp.lt.s32.totalorder %s295, 1
        %s299 = scalar_select %p298, %s295, 1
        %s300 = smul.addr %s297, 2
        %s301 = sadd.s32 %s299, %s300
        %s302 = smul.addr %s301, 8
        %s303 = scalar_lea.vmem %s3, %s302
        %p304 = pneg %p109
        %p305 = pneg %p106
        %s306 = sld [smem:[#allocation6 + %s38]]
        %p307 = scmp.lt.s32.totalorder %s39, %s306
        %s308 = scalar_select %p307, %s39, %s306
        %s309 = smul.u32 2, %s308
        %p310 = scmp.lt.s32.totalorder %s38, 1
        %s311 = scalar_select %p310, %s38, 1
        %p312 = scmp.lt.s32.totalorder %s309, 1
        %s313 = scalar_select %p312, %s309, 1
        %s314 = smul.addr %s311, 2
        %s315 = sadd.s32 %s313, %s314
        %s316 = smul.addr %s315, 8
        %s317 = scalar_lea.vmem %s4, %s316
        %p318 = pneg %p143
        %p319 = pneg %p140
        %p320 = pneg %p169
        %p321 = pneg %p166
        %s322 = sand.u32 %s156, 1
        %s323 = scalar_lea.sflag [#allocation8], %s322
        %s324 = sand.u32 %s156, 1
        %s325 = scalar_lea.vmem [#allocation7], %s324
        %p326 = pneg %p195
        %p327 = pneg %p192
        %s328 = sand.u32 %s182, 1
        %s329 = scalar_lea.sflag [#allocation10], %s328
        %s330 = sand.u32 %s182, 1
        %s331 = scalar_lea.vmem [#allocation9], %s330
        %s332 = sld [smem:[#allocation6 + %s38]]
        %p333 = scmp.lt.s32.totalorder %s39, %s332
        %s334 = scalar_select %p333, %s39, %s332
        %s335 = smul.u32 2, %s334
        %p336 = scmp.lt.s32.totalorder %s38, 1
        %s337 = scalar_select %p336, %s38, 1
        %p338 = scmp.lt.s32.totalorder %s335, 1
        %s339 = scalar_select %p338, %s335, 1
        %s340 = smul.addr %s337, 2
        %s341 = sadd.s32 %s339, %s340
        %s342 = smul.addr %s341, 8
        %s343 = scalar_lea.vmem %s2, %s342
        %s344 = sld [smem:[#allocation6 + %s38]]
        %p345 = scmp.lt.s32.totalorder %s39, %s344
        %s346 = scalar_select %p345, %s39, %s344
        %s347 = smul.u32 2, %s346
        %s348 = sld [smem:[#allocation6 + %s38]]
        %p349 = scmp.lt.s32.totalorder %s39, %s348
        %s350 = scalar_select %p349, %s39, %s348
        %s351 = smul.u32 2, %s350
        %p352 = scmp.lt.s32.totalorder %s38, 1
        %s353 = scalar_select %p352, %s38, 1
        %p354 = scmp.lt.s32.totalorder %s351, 1
        %s355 = scalar_select %p354, %s351, 1
        %s356 = smul.addr %s353, 2
        %s357 = sadd.s32 %s355, %s356
        %s358 = smul.addr %s357, 8
        %s359 = scalar_lea.vmem %s3, %s358
        %s360 = sld [smem:[#allocation6 + %s38]]
        %p361 = scmp.lt.s32.totalorder %s39, %s360
        %s362 = scalar_select %p361, %s39, %s360
        %s363 = smul.u32 2, %s362
        %s364 = sld [smem:[#allocation6 + %s38]]
        %p365 = scmp.lt.s32.totalorder %s39, %s364
        %s366 = scalar_select %p365, %s39, %s364
        %s367 = smul.u32 2, %s366
        %p368 = scmp.lt.s32.totalorder %s38, 1
        %s369 = scalar_select %p368, %s38, 1
        %p370 = scmp.lt.s32.totalorder %s367, 1
        %s371 = scalar_select %p370, %s367, 1
        %s372 = smul.addr %s369, 2
        %s373 = sadd.s32 %s371, %s372
        %s374 = smul.addr %s373, 8
        %s375 = scalar_lea.vmem %s4, %s374
        %s376 = sld [smem:[#allocation6 + %s38]]
        %p377 = scmp.lt.s32.totalorder %s39, %s376
        %s378 = scalar_select %p377, %s39, %s376
        %s379 = smul.u32 2, %s378
        %p380 = scmp.eq.s32.totalorder %s39, 0
        // Predicated region
        $region33: #{tpu_custom_call.1} parent=31 // pred_check
          %p381 = pneg %p380
        $region34: #{tpu_custom_call.1} parent=31 // pred_check_branch
          %383 = sbr.rel (%p381) target = $region36
        $region35: #{tpu_custom_call.1} parent=31 // pred_region
          %vm384 = vcmask 64512
          %385 = vst.msk [vmem:[#allocation2] sm:$0xff] %vm384, 0.0
          %386 = vst.msk [vmem:[#allocation2 + $0x8] sm:$0xff] %vm384, 0.0
          %387 = vst.msk [vmem:[#allocation3] sm:$0xff] %vm384, 0.0
          %388 = vst.msk [vmem:[#allocation3 + $0x8] sm:$0xff] %vm384, 0.0
        $region36: #{tpu_custom_call.1} parent=31 // pred_fallthru
          _
        %s389 = sld [smem:[#allocation5 + %s38]]
        %s390 = smul.u32 %s39, 16
        %s391 = ssub.s32 %s389, %s390
        %p392 = scmp.gt.s32.totalorder %s391, 0
        // Predicated region
        $region37: #{tpu_custom_call.1} parent=31 // pred_check
          %p393 = pneg %p392
        $region38: #{tpu_custom_call.1} parent=31 // pred_check_branch
          %395 = sbr.rel (%p393) target = $region40
        $region39: #{tpu_custom_call.1} parent=31 // pred_region
          %v396 = vlaneseq
          %v397 = vshrl.u32 %v396, 7
          %v398 = vadd.s32 %v397, 8
          %v399 = vstv %s391
          %vm400 = vcmp.lt.s32.totalorder %v397, %v399
          %vm401 = vcmp.lt.s32.totalorder %v398, %v399
          %v402 = vld [vmem:[%s375] sm:$0xff]
          %v403 = vld [vmem:[%s375 + $0x8] sm:$0xff]
          %v404 = vld [vmem:[%s343] sm:$0xff]
          %v405 = vld [vmem:[%s343 + $0x8] sm:$0xff]
          %v406 = vsub.f32 %v404, %v402
          %v407 = vsub.f32 %v405, %v403
          %v408 = vsel %vm400, %v406, 0.0
          %v409 = vsel %vm401, %v407, 0.0
          %v410 = vld [vmem:[%s359] sm:$0xff]
          %v411 = vld [vmem:[%s359 + $0x8] sm:$0xff]
          %v412 = vsub.f32 %v410, %v402
          %v413 = vsub.f32 %v411, %v403
          %v414 = vsel %vm400, %v412, 0.0
          %v415 = vsel %vm401, %v413, 0.0
          %v416 = vld [vmem:[#allocation2] sm:$0xff]
          %v417 = vld [vmem:[#allocation2 + $0x8] sm:$0xff]
          %v418 = vand.u32 2147483647, %v408
          %v419 = vand.u32 2147483647, %v409
          %v420 = vand.u32 2147483647, %v414
          %v421 = vand.u32 2147483647, %v415
          %v422 = vadd.f32 %v418, %v420
          %v423 = vadd.f32 %v419, %v421
          %v424 = vadd.f32 %v416, %v422
          %v425 = vadd.f32 %v417, %v423
          %vm426 = vcmask 64512
          %427 = vst.msk [vmem:[#allocation2] sm:$0xff] %vm426, %v424
          %428 = vst.msk [vmem:[#allocation2 + $0x8] sm:$0xff] %vm426, %v425
          %v429 = vld [vmem:[#allocation3] sm:$0xff]
          %v430 = vld [vmem:[#allocation3 + $0x8] sm:$0xff]
          %v431 = vmul.f32 %v408, %v408
          %v432 = vmul.f32 %v409, %v409
          %v433 = vmul.f32 %v414, %v414
          %v434 = vmul.f32 %v415, %v415
          %v435 = vadd.f32 %v431, %v433
          %v436 = vadd.f32 %v432, %v434
          %v437 = vadd.f32 %v429, %v435
          %v438 = vadd.f32 %v430, %v436
          %439 = vst.msk [vmem:[#allocation3] sm:$0xff] %vm426, %v437
          %440 = vst.msk [vmem:[#allocation3 + $0x8] sm:$0xff] %vm426, %v438
        $region40: #{tpu_custom_call.1} parent=31 // pred_fallthru
          _
        // Predicated region
        $region41: #{tpu_custom_call.1} parent=31 // pred_check
          %p441 = pneg %p380
        $region42: #{tpu_custom_call.1} parent=31 // pred_check_branch
          %443 = sbr.rel (%p441) target = $region44
        $region43: #{tpu_custom_call.1} parent=31 // pred_region
          %v444 = vld [vmem:[#allocation2] sm:$0xff]
          %v445 = vld [vmem:[#allocation2 + $0x8] sm:$0xff]
          %vm446 = vcmask 64512
          %v447 = vsel %vm446, %v444, 0.0
          %v448 = vsel %vm446, %v445, 0.0
          %v449 = vadd.f32 %v447, %v448
          %v450 = vrot.slane %v449, 4
          %v451 = vadd.f32 %v449, %v450
          %v452 = vrot.slane %v451, 2
          %v453 = vadd.f32 %v451, %v452
          %v454 = vrot.slane %v453, 1
          %v455 = vadd.f32 %v453, %v454
          %vm456 = vcmask 57344
          %457 = vst.msk [vmem:[%s325] sm:$0x1] %vm456, %v455
          %v458 = vld [vmem:[#allocation3] sm:$0xff]
          %v459 = vld [vmem:[#allocation3 + $0x8] sm:$0xff]
          %v460 = vsel %vm446, %v458, 0.0
          %v461 = vsel %vm446, %v459, 0.0
          %v462 = vadd.f32 %v460, %v461
          %v463 = vrot.slane %v462, 4
          %v464 = vadd.f32 %v462, %v463
          %v465 = vrot.slane %v464, 2
          %v466 = vadd.f32 %v464, %v465
          %v467 = vrot.slane %v466, 1
          %v468 = vadd.f32 %v466, %v467
          %469 = vst.msk [vmem:[%s331] sm:$0x1] %vm456, %v468
        $region44: #{tpu_custom_call.1} parent=31 // pred_fallthru
          _
        %s470 = sand.u32 %s156, 1
        %s471 = scalar_lea.sflag [#allocation8], %s470
        %s472 = sand.u32 %s156, 1
        %s473 = scalar_lea.vmem [#allocation7], %s472
        %s474 = sand.u32 %s182, 1
        %s475 = scalar_lea.sflag [#allocation10], %s474
        %s476 = sand.u32 %s182, 1
        %s477 = scalar_lea.vmem [#allocation9], %s476
        // Predicated region
        $region45: #{tpu_custom_call.1} parent=31 // pred_check
          %p478 = pneg %p166
        $region46: #{tpu_custom_call.1} parent=31 // pred_check_branch
          %480 = sbr.rel (%p478) target = $region48
        $region47: #{tpu_custom_call.1} parent=31 // pred_region
          %s482 = ssub.s32 16, 16
          %483 = vsyncadd %s471, %s482
          %s484 = smul.addr %s38, 16
          %s485 = scalar_lea.hbm %s5, %s484
          %s487 = sshll.u32 %s473, 4
          %s488 = int_to_ptr.vmem [resolvable:$true] %s487
          %490 = dma.vmem_to_hbm [thread:$0]  %s488, 16, %s485, %s471
        $region48: #{tpu_custom_call.1} parent=31 // pred_fallthru
          _
        // Predicated region
        $region49: #{tpu_custom_call.1} parent=31 // pred_check
          %p491 = pneg %p192
        $region50: #{tpu_custom_call.1} parent=31 // pred_check_branch
          %493 = sbr.rel (%p491) target = $region52
        $region51: #{tpu_custom_call.1} parent=31 // pred_region
          %s495 = ssub.s32 16, 16
          %496 = vsyncadd %s475, %s495
          %s497 = smul.addr %s38, 16
          %s498 = scalar_lea.hbm %s6, %s497
          %s500 = sshll.u32 %s477, 4
          %s501 = int_to_ptr.vmem [resolvable:$true] %s500
          %503 = dma.vmem_to_hbm [thread:$0]  %s501, 16, %s498, %s475
        $region52: #{tpu_custom_call.1} parent=31 // pred_fallthru
          _
      $region32: #{tpu_custom_call.1} parent=5 // pred_fallthru
        _
      %p504 = scmp.le.s32.totalorder 2, %s29
      // Predicated region
      $region53: #{tpu_custom_call.1} parent=5 // pred_check
        %p505 = pneg %p504
      $region54: #{tpu_custom_call.1} parent=5 // pred_check_branch
        %507 = sbr.rel (%p505) target = $region56
      $region55: #{tpu_custom_call.1} parent=5 // pred_region
        %s508 = ssub.s32 %s29, 2
        // Predicated region
        $region57: #{tpu_custom_call.1} parent=55 // pred_check
          %p509 = pneg %p172
        $region58: #{tpu_custom_call.1} parent=55 // pred_check_branch
          %511 = sbr.rel (%p509) target = $region60
        $region59: #{tpu_custom_call.1} parent=55 // pred_region
          %s512 = sand.u32 %s157, 1
          %s513 = scalar_lea.sflag [#allocation8], %s512
          %s514 = sand.u32 %s157, 1
          %s515 = scalar_lea.vmem [#allocation7], %s514
          %516 = dma.done %s513, 16
        $region60: #{tpu_custom_call.1} parent=55 // pred_fallthru
          _
        // Predicated region
        $region61: #{tpu_custom_call.1} parent=55 // pred_check
          %p517 = pneg %p198
        $region62: #{tpu_custom_call.1} parent=55 // pred_check_branch
          %519 = sbr.rel (%p517) target = $region64
        $region63: #{tpu_custom_call.1} parent=55 // pred_region
          %s520 = sand.u32 %s183, 1
          %s521 = scalar_lea.sflag [#allocation10], %s520
          %s522 = sand.u32 %s183, 1
          %s523 = scalar_lea.vmem [#allocation9], %s522
          %524 = dma.done %s521, 16
        $region64: #{tpu_custom_call.1} parent=55 // pred_fallthru
          _
      $region56: #{tpu_custom_call.1} parent=5 // pred_fallthru
        _
    $region6: #{tpu_custom_call.1} parent=1 // loop_footer
      %s33 = sadd.s32 1, %s29
    $region7: #{tpu_custom_call.1} parent=1 // loop_footer_branch
      %28 = sbr.rel target = $region3
    $region8: #{tpu_custom_call.1} parent=1 // loop_exit
      _
    %525 = vsyncpa [#allocation8], 1
    %s526 = scalar_lea.sflag [#allocation8], 1
    %527 = vsyncpa %s526, 1
    %528 = vsyncpa [#allocation10], 1
    %s529 = scalar_lea.sflag [#allocation10], 1
    %530 = vsyncpa %s529, 1

</llo_original>
